<compile_context>
chip_gen: v7x
topology: tpu7x:2x2x1
jax: 0.10.0
libtpu: 0.0.40
codegen_flags: <defaults>
</compile_context>

<pallas_src>
import functools

import jax
import jax.numpy as jnp
from jax import lax
from jax.experimental import pallas as pl
from jax.experimental.pallas import tpu as pltpu

_LANES = 128
_CHUNK_ROWS = 512                      # inner-loop chunk granularity (rows)
_MAX_CHUNKS = 8                        # cap on inner-loop trip count
_MAX_STEP_BYTES = 8 * 1024 * 1024      # combined bytes of both inputs / step
_VMEM_LIMIT_BYTES = 48 * 1024 * 1024   # fits every gen incl. v7x (64 MiB/TC)

_NATIVE_DTYPES = (jnp.float32, jnp.bfloat16, jnp.int8, jnp.int32)


def _stream_dtype(a):
    """Pick a cheap on-the-wire dtype; the kernel casts to f32 internally."""
    if a.dtype == jnp.bool_:
        return a.astype(jnp.int8)          # 1 byte/elem instead of 4
    if any(a.dtype == d for d in _NATIVE_DTYPES):
        return a                           # stream natively, zero copies
    return a.astype(jnp.float32)


def _iou_sums_kernel(x_ref, t_ref, out_ref, *, rows, block_rows, chunk_rows,
                     num_chunks, steps, overhang, num_blocks, mask_last):
    p = pl.program_id(0)
    j = pl.program_id(1)
    # Global block index (always < num_blocks thanks to the overlapped map).
    g = p * (steps - overhang) + j

    @pl.when(j == 0)
    def _init():
        out_ref[...] = jnp.zeros_like(out_ref)

    def _sigmoid(v):
        # One EUP push per vreg (tanh) instead of exp + reciprocal.
        return 0.5 * jnp.tanh(0.5 * v) + 0.5

    if chunk_rows % 8 != 0:
        # Tiny single-block fallback (rows < 8).  Block == full array, so no
        # masking is ever needed on this path.
        x = x_ref[...].astype(jnp.float32)
        t = t_ref[...].astype(jnp.float32)
        s = _sigmoid(x)
        inter = s * t
        total = s + t
        out_ref[0, 0, 0:1, :] += inter.sum(axis=0, keepdims=True)
        out_ref[0, 1, 0:1, :] += total.sum(axis=0, keepdims=True)
        return

    def _block_sums(masked):
        def body(c, carry):
            acc_i, acc_t = carry
            r0 = pl.multiple_of(c * chunk_rows, chunk_rows)
            x = x_ref[pl.ds(r0, chunk_rows), :].astype(jnp.float32)
            t = t_ref[pl.ds(r0, chunk_rows), :].astype(jnp.float32)
            s = _sigmoid(x)
            inter = s * t
            total = s + t
            if masked:
                row = lax.broadcasted_iota(jnp.int32, (chunk_rows, 1), 0)
                valid = (g * block_rows + c * chunk_rows + row) < rows
                inter = jnp.where(valid, inter, 0.0)
                total = jnp.where(valid, total, 0.0)
            # (chunk_rows,128) -> (chunk_rows//8, 8, 128): exactly the vreg
            # tiling, so the sum is pure per-vreg VPU adds.
            acc_i = acc_i + inter.reshape(-1, 8, _LANES).sum(axis=0)
            acc_t = acc_t + total.reshape(-1, 8, _LANES).sum(axis=0)
            return acc_i, acc_t

        zeros = jnp.zeros((8, _LANES), jnp.float32)
        return lax.fori_loop(0, num_chunks, body, (zeros, zeros))

    def _flush(masked):
        bi, bt = _block_sums(masked)
        out_ref[0, 0, :, :] += bi
        out_ref[0, 1, :, :] += bt

    if overhang:
        # With an odd block count, core p>0 re-reads one already-covered
        # block at its first step(s); skip its accumulation.
        skip = jnp.logical_and(p > 0, j < overhang)
        keep = jnp.logical_not(skip)

    if mask_last:
        is_edge = g == (num_blocks - 1)
        if overhang:
            pl.when(jnp.logical_and(keep, is_edge))(lambda: _flush(True))
            pl.when(jnp.logical_and(keep, jnp.logical_not(is_edge)))(
                lambda: _flush(False))
        else:
            pl.when(is_edge)(lambda: _flush(True))
            pl.when(jnp.logical_not(is_edge))(lambda: _flush(False))
    else:
        if overhang:
            pl.when(keep)(lambda: _flush(False))
        else:
            _flush(False)


def iou_loss(inputs, targets, smooth=1.0):
    """Pallas equivalent of IoULoss.forward.  Returns a float32 scalar."""
    n = inputs.size
    assert targets.size == n
    if n == 0:
        return jnp.float32(0.0)

    x = _stream_dtype(inputs.reshape(-1))
    t = _stream_dtype(targets.reshape(-1))
    smooth = jnp.float32(smooth)

    tail = n % _LANES
    n_main = n - tail

    # <128-element tail handled in plain JAX (no full-array pad copy).
    if tail:
        xt = x[n_main:].astype(jnp.float32)
        tt = t[n_main:].astype(jnp.float32)
        st = jax.nn.sigmoid(xt)
        tail_inter = jnp.sum(st * tt)
        tail_total = jnp.sum(st + tt)
    else:
        tail_inter = jnp.float32(0.0)
        tail_total = jnp.float32(0.0)

    if n_main == 0:
        intersection, total = tail_inter, tail_total
    else:
        rows = n_main // _LANES
        x2 = (x[:n_main] if tail else x).reshape(rows, _LANES)
        t2 = (t[:n_main] if tail else t).reshape(rows, _LANES)

        if rows < _CHUNK_ROWS:
            # Single small block == full array (any row count is legal).
            block_rows = rows
            chunk_rows = rows
            num_chunks = 1
            num_blocks = 1
            num_cores = 1
            steps = 1
            overhang = 0
            mask_last = False
        else:
            per_row_bytes = _LANES * (x2.dtype.itemsize + t2.dtype.itemsize)
            max_rows = max(
                _CHUNK_ROWS,
                (_MAX_STEP_BYTES // per_row_bytes) // _CHUNK_ROWS * _CHUNK_ROWS)
            block_rows = min(max_rows, (rows // _CHUNK_ROWS) * _CHUNK_ROWS)
            num_chunks = min(_MAX_CHUNKS, block_rows // _CHUNK_ROWS)
            chunk_rows = block_rows // num_chunks          # multiple of 32
            num_blocks = -(-rows // block_rows)
            num_cores = 2 if num_blocks >= 2 else 1
            steps = -(-num_blocks // num_cores)
            overhang = num_cores * steps - num_blocks      # 0 or 1
            mask_last = (rows % block_rows) != 0

        # Affine, always-in-range block map: core p starts at
        # p*(steps - overhang); the 'overhang' overlapped block is skipped
        # in-kernel by core p>0.
        in_map = lambda pi, ji: (pi * (steps - overhang) + ji, 0)
        out_map = lambda pi, ji: (pi, 0, 0, 0)

        kernel = functools.partial(
            _iou_sums_kernel,
            rows=rows, block_rows=block_rows, chunk_rows=chunk_rows,
            num_chunks=num_chunks, steps=steps, overhang=overhang,
            num_blocks=num_blocks, mask_last=mask_last)

        bytes_accessed = (x2.size * x2.dtype.itemsize
                          + t2.size * t2.dtype.itemsize
                          + num_cores * 2 * 8 * _LANES * 4)
        cost = pl.CostEstimate(flops=8 * n_main, transcendentals=n_main,
                               bytes_accessed=bytes_accessed)

        # Per-core partial sums: [:, 0] = intersection vreg, [:, 1] = total.
        partials = pl.pallas_call(
            kernel,
            out_shape=jax.ShapeDtypeStruct((num_cores, 2, 8, _LANES),
                                           jnp.float32),
            grid_spec=pltpu.PrefetchScalarGridSpec(
                num_scalar_prefetch=0,
                grid=(num_cores, steps),
                in_specs=[pl.BlockSpec((block_rows, _LANES), in_map),
                          pl.BlockSpec((block_rows, _LANES), in_map)],
                out_specs=pl.BlockSpec((1, 2, 8, _LANES), out_map),
            ),
            compiler_params=pltpu.CompilerParams(
                dimension_semantics=("parallel", "arbitrary"),
                vmem_limit_bytes=_VMEM_LIMIT_BYTES),
            cost_estimate=cost,
        )(x2, t2)

        intersection = jnp.sum(partials[:, 0]) + tail_inter
        total = jnp.sum(partials[:, 1]) + tail_total

    union = total - intersection
    iou = (intersection + smooth) / (union + smooth)
    return (1.0 - iou).astype(jnp.float32)


def _iou_loss_ref(inputs, targets, smooth=1.0):
    s = jax.nn.sigmoid(inputs.reshape(-1).astype(jnp.float32))
    t = targets.reshape(-1).astype(jnp.float32)
    inter = jnp.sum(s * t)
    total = jnp.sum(s + t)
    union = total - inter
    return 1.0 - (inter + smooth) / (union + smooth)


if __name__ == "__main__":
    key = jax.random.PRNGKey(0)
    k1, k2, k3, k4, k5, k6 = jax.random.split(key, 6)

    # 1) Typical NCHW logits + float targets (lane-aligned size, small path).
    x = jax.random.normal(k1, (2, 4, 16, 16), dtype=jnp.float32)
    t = (jax.random.uniform(k2, (2, 4, 16, 16)) > 0.5).astype(jnp.float32)
    out = jax.block_until_ready(iou_loss(x, t, smooth=1.0))
    ref = jax.block_until_ready(_iou_loss_ref(x, t, smooth=1.0))
    assert jnp.allclose(out, ref, rtol=1e-5, atol=1e-5), (out, ref)

    # 2) Ragged size + bool targets: exercises the plain-JAX tail, the
    #    native narrow-dtype target stream, and the tiny fallback path.
    x2 = jax.random.normal(k3, (2, 3, 7, 5), dtype=jnp.float32)
    t2 = jax.random.uniform(k4, (2, 3, 7, 5)) > 0.5
    out2 = jax.block_until_ready(iou_loss(x2, t2, smooth=1.0))
    ref2 = jax.block_until_ready(_iou_loss_ref(x2, t2, smooth=1.0))
    assert jnp.allclose(out2, ref2, rtol=1e-5, atol=1e-5), (out2, ref2)

    # 3) Larger flat input: exercises the streaming path (multi-block grid,
    #    2-way core split with an overhang block, masked last block, tail,
    #    and the in-kernel chunk loop).
    n3 = 16385 * 128 + 37
    x3 = jax.random.normal(k5, (n3,), dtype=jnp.float32)
    t3 = (jax.random.uniform(k6, (n3,)) > 0.5).astype(jnp.float32)
    out3 = jax.block_until_ready(iou_loss(x3, t3, smooth=1.0))
    ref3 = jax.block_until_ready(_iou_loss_ref(x3, t3, smooth=1.0))
    assert jnp.allclose(out3, ref3, rtol=1e-4, atol=1e-4), (out3, ref3)

    print("KERNEL_OK")
</pallas_src>

<mosaic_0001>
module attributes {stable_mosaic.version = 11 : i64} {
  func.func @_iou_sums_kernel(%arg0: i32, %arg1: i32, %arg2: memref<16x128xf32, #tpu.memory_space<vmem>>, %arg3: memref<16x128xf32, #tpu.memory_space<vmem>>, %arg4: memref<1x2x8x128xf32, #tpu.memory_space<vmem>>) attributes {dimension_semantics = [#tpu.dimension_semantics<parallel>, #tpu.dimension_semantics<arbitrary>], iteration_bounds = array<i64: 1, 1>, scalar_prefetch = 0 : i64, scratch_operands = 0 : i64, tpu.core_type = #tpu.core_type<tc>, window_params = [{transform_indices = @transform_0, window_bounds = array<i64: 16, 128>}, {transform_indices = @transform_1, window_bounds = array<i64: 16, 128>}, {transform_indices = @transform_2, window_bounds = array<i64: 1, 2, 8, 128>}]} {
    %c0_i32 = arith.constant 0 : i32
    %0 = arith.cmpi eq, %arg1, %c0_i32 : i32
    %1 = arith.extui %0 : i1 to i32
    %c0_i32_0 = arith.constant 0 : i32
    %2 = arith.cmpi ne, %1, %c0_i32_0 : i32
    scf.if %2 {
      %cst_23 = arith.constant 0.000000e+00 : f32
      %37 = vector.broadcast %cst_23 : f32 to vector<1x2x8x128xf32>
      %c0_24 = arith.constant 0 : index
      %c0_25 = arith.constant 0 : index
      %c0_26 = arith.constant 0 : index
      %c0_27 = arith.constant 0 : index
      %38 = vector.load %arg4[%c0_24, %c0_25, %c0_26, %c0_27] : memref<1x2x8x128xf32, #tpu.memory_space<vmem>>, vector<1x2x8x128xf32>
      tpu.vector_store %arg4[%c0_24, %c0_25, %c0_26, %c0_27], %37 {strides = array<i32>} : memref<1x2x8x128xf32, #tpu.memory_space<vmem>>, vector<1x2x8x128xf32>,
    } else {
    }
    %cst = arith.constant 0.000000e+00 : f32
    %3 = vector.broadcast %cst : f32 to vector<8x128xf32>
    %c0_i32_1 = arith.constant 0 : i32
    %c16_i32 = arith.constant 16 : i32
    %4 = arith.muli %c0_i32_1, %c16_i32 : i32
    %5 = tpu.assume_multiple %4, 16 : i32
    %6 = arith.index_cast %5 : i32 to index
    %c0 = arith.constant 0 : index
    %7 = vector.load %arg2[%6, %c0] : memref<16x128xf32, #tpu.memory_space<vmem>>, vector<16x128xf32>
    %8 = arith.index_cast %5 : i32 to index
    %c0_2 = arith.constant 0 : index
    %9 = vector.load %arg3[%8, %c0_2] : memref<16x128xf32, #tpu.memory_space<vmem>>, vector<16x128xf32>
    %cst_3 = arith.constant 5.000000e-01 : f32
    %10 = vector.broadcast %cst_3 : f32 to vector<16x128xf32>
    %11 = arith.mulf %10, %7 : vector<16x128xf32>
    %12 = math.tanh %11 : vector<16x128xf32>
    %cst_4 = arith.constant 5.000000e-01 : f32
    %13 = vector.broadcast %cst_4 : f32 to vector<16x128xf32>
    %14 = arith.mulf %13, %12 : vector<16x128xf32>
    %cst_5 = arith.constant 5.000000e-01 : f32
    %15 = vector.broadcast %cst_5 : f32 to vector<16x128xf32>
    %16 = arith.addf %14, %15 : vector<16x128xf32>
    %17 = arith.mulf %16, %9 : vector<16x128xf32>
    %18 = arith.addf %16, %9 : vector<16x128xf32>
    %19 = vector.shape_cast %17 : vector<16x128xf32> to vector<2x8x128xf32>
    %cst_6 = arith.constant dense<0.000000e+00> : vector<8x128xf32>
    %20 = vector.multi_reduction <add>, %19, %cst_6 [0] : vector<2x8x128xf32> to vector<8x128xf32>
    %21 = arith.addf %3, %20 : vector<8x128xf32>
    %22 = vector.shape_cast %18 : vector<16x128xf32> to vector<2x8x128xf32>
    %cst_7 = arith.constant dense<0.000000e+00> : vector<8x128xf32>
    %23 = vector.multi_reduction <add>, %22, %cst_7 [0] : vector<2x8x128xf32> to vector<8x128xf32>
    %24 = arith.addf %3, %23 : vector<8x128xf32>
    %c1_i32 = arith.constant 1 : i32
    %c0_8 = arith.constant 0 : index
    %c0_9 = arith.constant 0 : index
    %c0_10 = arith.constant 0 : index
    %c0_11 = arith.constant 0 : index
    %25 = vector.load %arg4[%c0_8, %c0_9, %c0_10, %c0_11] : memref<1x2x8x128xf32, #tpu.memory_space<vmem>>, vector<1x1x8x128xf32>
    %26 = vector.shape_cast %25 : vector<1x1x8x128xf32> to vector<8x128xf32>
    %27 = arith.addf %26, %21 : vector<8x128xf32>
    %c0_12 = arith.constant 0 : index
    %c0_13 = arith.constant 0 : index
    %c0_14 = arith.constant 0 : index
    %c0_15 = arith.constant 0 : index
    %28 = vector.load %arg4[%c0_12, %c0_13, %c0_14, %c0_15] : memref<1x2x8x128xf32, #tpu.memory_space<vmem>>, vector<1x1x8x128xf32>
    %29 = vector.shape_cast %28 : vector<1x1x8x128xf32> to vector<8x128xf32>
    %30 = vector.shape_cast %27 : vector<8x128xf32> to vector<1x1x8x128xf32>
    tpu.vector_store %arg4[%c0_12, %c0_13, %c0_14, %c0_15], %30 {strides = array<i32>} : memref<1x2x8x128xf32, #tpu.memory_space<vmem>>, vector<1x1x8x128xf32>,
    %c0_16 = arith.constant 0 : index
    %c1 = arith.constant 1 : index
    %c0_17 = arith.constant 0 : index
    %c0_18 = arith.constant 0 : index
    %31 = vector.load %arg4[%c0_16, %c1, %c0_17, %c0_18] : memref<1x2x8x128xf32, #tpu.memory_space<vmem>>, vector<1x1x8x128xf32>
    %32 = vector.shape_cast %31 : vector<1x1x8x128xf32> to vector<8x128xf32>
    %33 = arith.addf %32, %24 : vector<8x128xf32>
    %c0_19 = arith.constant 0 : index
    %c1_20 = arith.constant 1 : index
    %c0_21 = arith.constant 0 : index
    %c0_22 = arith.constant 0 : index
    %34 = vector.load %arg4[%c0_19, %c1_20, %c0_21, %c0_22] : memref<1x2x8x128xf32, #tpu.memory_space<vmem>>, vector<1x1x8x128xf32>
    %35 = vector.shape_cast %34 : vector<1x1x8x128xf32> to vector<8x128xf32>
    %36 = vector.shape_cast %33 : vector<8x128xf32> to vector<1x1x8x128xf32>
    tpu.vector_store %arg4[%c0_19, %c1_20, %c0_21, %c0_22], %36 {strides = array<i32>} : memref<1x2x8x128xf32, #tpu.memory_space<vmem>>, vector<1x1x8x128xf32>,
    return
  }
  func.func @transform_0(%arg0: i32, %arg1: i32) -> (i32, i32) {
    %c1_i32 = arith.constant 1 : i32
    %0 = arith.muli %arg0, %c1_i32 : i32
    %1 = arith.addi %0, %arg1 : i32
    %c0_i32 = arith.constant 0 : i32
    %c0_i32_0 = arith.constant 0 : i32
    return %1, %c0_i32 : i32, i32
  }
  func.func @transform_1(%arg0: i32, %arg1: i32) -> (i32, i32) {
    %c1_i32 = arith.constant 1 : i32
    %0 = arith.muli %arg0, %c1_i32 : i32
    %1 = arith.addi %0, %arg1 : i32
    %c0_i32 = arith.constant 0 : i32
    %c0_i32_0 = arith.constant 0 : i32
    return %1, %c0_i32 : i32, i32
  }
  func.func @transform_2(%arg0: i32, %arg1: i32) -> (i32, i32, i32, i32) {
    %c0_i32 = arith.constant 0 : i32
    %c0_i32_0 = arith.constant 0 : i32
    %c0_i32_1 = arith.constant 0 : i32
    %c0_i32_2 = arith.constant 0 : i32
    return %arg0, %c0_i32, %c0_i32_0, %c0_i32_1 : i32, i32, i32, i32
  }
}

</mosaic_0001>

<llo_original>
// kernel: tpu_custom_call.1
$region0: #{tpu_custom_call.1}
  #allocation0 [shape = 'u32[]', space=smem, size = 0x4, offset = 0x4, fixed_abs, tag = 'smem constant byte address 0x4 - core index']
  #allocation1 [shape = 'u32[144,128]{1,0:T(1,128)}', space=vmem, size = 0x12000, scoped, tag = 'internal scratch']
  %s0 = inlined_call_operand.hbm [shape: f32[16,128], index: 0, kind: input, shape index: {}]
  %s1 = inlined_call_operand.hbm [shape: f32[16,128], index: 1, kind: input, shape index: {}]
  %s2 = inlined_call_operand.hbm [shape: f32[1,2,8,128], index: 2, kind: output, shape index: {}]
  %s3 = sld [smem:[#allocation0]]
  $region30: #{tpu_custom_call.1} parent=0
    _
  %s5 = ssub.s32 1, %s3
  %s6 = scalar_select 0, %s5, %s3
  $region1: #{tpu_custom_call.1} parent=0
    #allocation2 [shape = 'u8[8192]{0}', space=vmem, size = 0x2000, scoped, tag = 'input window, operand 0, single buffered']
    #allocation3 [shape = 's32[1]{0}', space=sflag, size = 0x4, scoped, tag = 'scoped memory for tpu_custom_call.1']
    #allocation4 [shape = 's32[1]{0}', space=sflag, size = 0x4, scoped, tag = 'scoped memory for tpu_custom_call.1']
    #allocation5 [shape = 'u8[8192]{0}', space=vmem, size = 0x2000, scoped, tag = 'input window, operand 1, single buffered']
    #allocation6 [shape = 's32[1]{0}', space=sflag, size = 0x4, scoped, tag = 'scoped memory for tpu_custom_call.1']
    #allocation7 [shape = 'u8[8192]{0}', space=vmem, size = 0x2000, scoped, tag = 'output window, operand 0, single buffered']
    %7 = vsyncpa [#allocation3], 0
    %8 = vsyncpa [#allocation6], 0
    %9 = vsyncpa [#allocation4], 0
    // Predicated region
    $region2: #{tpu_custom_call.1} parent=1 // pred_check
      _
    $region3: #{tpu_custom_call.1} parent=1 // pred_check_branch
      %11 = sbr.rel (0) target = $region5
    $region4: #{tpu_custom_call.1} parent=1 // pred_region
      %s12 = sadd.s32 0, 0
      %s13 = smul.u32 2, %s12
      %s15 = ssub.s32 256, 256
      %16 = vsyncadd [#allocation3], %s15
      %s17 = smul.addr %s13, 128
      %s18 = scalar_lea.hbm %s0, %s17
      %s19 = sshll.u32 [#allocation2], 4
      %s20 = int_to_ptr.vmem [resolvable:$true] %s19
      %25 = dma.hbm_to_vmem [thread:$0]  %s18, 256, %s20, [#allocation3], 128, 128, 8
    $region5: #{tpu_custom_call.1} parent=1 // pred_fallthru
      _
    // Predicated region
    $region6: #{tpu_custom_call.1} parent=1 // pred_check
      _
    $region7: #{tpu_custom_call.1} parent=1 // pred_check_branch
      %27 = sbr.rel (0) target = $region9
    $region8: #{tpu_custom_call.1} parent=1 // pred_region
      %s28 = sadd.s32 0, 0
      %s29 = smul.u32 2, %s28
      %s31 = ssub.s32 256, 256
      %32 = vsyncadd [#allocation6], %s31
      %s33 = smul.addr %s29, 128
      %s34 = scalar_lea.hbm %s1, %s33
      %s35 = sshll.u32 [#allocation5], 4
      %s36 = int_to_ptr.vmem [resolvable:$true] %s35
      %41 = dma.hbm_to_vmem [thread:$0]  %s34, 256, %s36, [#allocation6], 128, 128, 8
    $region9: #{tpu_custom_call.1} parent=1 // pred_fallthru
      _
    // Predicated region
    $region10: #{tpu_custom_call.1} parent=1 // pred_check
      _
    $region11: #{tpu_custom_call.1} parent=1 // pred_check_branch
      %43 = sbr.rel (0) target = $region13
    $region12: #{tpu_custom_call.1} parent=1 // pred_region
      %44 = dma.done [#allocation3], 256
    $region13: #{tpu_custom_call.1} parent=1 // pred_fallthru
      _
    // Predicated region
    $region14: #{tpu_custom_call.1} parent=1 // pred_check
      _
    $region15: #{tpu_custom_call.1} parent=1 // pred_check_branch
      %46 = sbr.rel (0) target = $region17
    $region16: #{tpu_custom_call.1} parent=1 // pred_region
      %47 = dma.done [#allocation6], 256
    $region17: #{tpu_custom_call.1} parent=1 // pred_fallthru
      _
    %s48 = sadd.s32 0, 0
    %s49 = smul.u32 2, %s48
    %s50 = sadd.s32 0, 0
    %s51 = smul.u32 2, %s50
    %p52 = scmp.eq.s32.totalorder 0, 0
    // Predicated region
    $region18: #{tpu_custom_call.1} parent=1 // pred_check
      %p53 = pneg %p52
    $region19: #{tpu_custom_call.1} parent=1 // pred_check_branch
      %55 = sbr.rel (%p53) target = $region21
    $region20: #{tpu_custom_call.1} parent=1 // pred_region
      %56 = vst [vmem:[#allocation7] sm:$0xff] 0.0
      %57 = vst [vmem:[#allocation7 + $0x8] sm:$0xff] 0.0
    $region21: #{tpu_custom_call.1} parent=1 // pred_fallthru
      _
    %v58 = vld [vmem:[#allocation2] sm:$0xff]
    %v59 = vld [vmem:[#allocation2 + $0x8] sm:$0xff]
    %v60 = vld [vmem:[#allocation5] sm:$0xff]
    %v61 = vld [vmem:[#allocation5 + $0x8] sm:$0xff]
    %v62 = vmul.f32 %v58, 0.5
    %v63 = vmul.f32 %v59, 0.5
    %v64 = vtanh.pop %v62
    %v65 = vtanh.pop %v63
    %v66 = vmul.f32 %v64, 0.5
    %v67 = vmul.f32 %v65, 0.5
    %v68 = vadd.f32 %v66, 0.5
    %v69 = vadd.f32 %v67, 0.5
    %v70 = vmul.f32 %v68, %v60
    %v71 = vmul.f32 %v69, %v61
    %v72 = vadd.f32 %v68, %v60
    %v73 = vadd.f32 %v69, %v61
    %v74 = vadd.f32 %v70, %v71
    %v75 = vadd.f32 %v74, 0.0
    %v76 = vadd.f32 %v72, %v73
    %v77 = vadd.f32 %v76, 0.0
    %v78 = vld [vmem:[#allocation7] sm:$0xff]
    %v79 = vadd.f32 %v78, %v75
    %80 = vst [vmem:[#allocation7] sm:$0xff] %v79
    %s81 = scalar_lea.vmem [#allocation7], 8
    %v82 = vld [vmem:[%s81] sm:$0xff]
    %v83 = vadd.f32 %v82, %v77
    %84 = vst [vmem:[%s81] sm:$0xff] %v83
    // Predicated region
    $region22: #{tpu_custom_call.1} parent=1 // pred_check
      _
    $region23: #{tpu_custom_call.1} parent=1 // pred_check_branch
      %86 = sbr.rel (0) target = $region25
    $region24: #{tpu_custom_call.1} parent=1 // pred_region
      %s88 = ssub.s32 256, 256
      %89 = vsyncadd [#allocation4], %s88
      %s90 = sshll.u32 [#allocation7], 4
      %s91 = int_to_ptr.vmem [resolvable:$true] %s90
      %96 = dma.vmem_to_hbm [thread:$0]  %s91, 256, %s2, [#allocation4], 128, 128, 8
    $region25: #{tpu_custom_call.1} parent=1 // pred_fallthru
      _
    // Predicated region
    $region26: #{tpu_custom_call.1} parent=1 // pred_check
      _
    $region27: #{tpu_custom_call.1} parent=1 // pred_check_branch
      %98 = sbr.rel (0) target = $region29
    $region28: #{tpu_custom_call.1} parent=1 // pred_region
      %99 = dma.done [#allocation4], 256
    $region29: #{tpu_custom_call.1} parent=1 // pred_fallthru
      _
    %100 = vsyncpa [#allocation3], 1
    %101 = vsyncpa [#allocation6], 1
    %102 = vsyncpa [#allocation4], 1

</llo_original>
